<compile_context>
chip_gen: v7x
topology: tpu7x:2x2x1
jax: 0.10.0
libtpu: 0.0.40
codegen_flags: <defaults>
</compile_context>

<pallas_src>
import functools

import jax
import jax.numpy as jnp
from jax.experimental import pallas as pl
from jax.experimental.pallas import tpu as pltpu


def _pos_embs_kernel(seed_ref, x_ref, pos_ref, o_ref, *, dropout_rate, training, width):
    # x_ref: (TB, W)   pos_ref: (1, W)   o_ref: (TB, W)   with W = S * E
    x = x_ref[...]
    out = x + pos_ref[...].astype(x.dtype)          # broadcast add, no f32 upcast

    if training and dropout_rate > 0.0:
        # Stateless counter-based PRNG: splitmix32-style hash of
        # (seed, global flat element index).  Deterministic, order-independent.
        rows = out.shape[0]
        row0 = (pl.program_id(0) * rows).astype(jnp.uint32)
        ridx = jax.lax.broadcasted_iota(jnp.uint32, out.shape, 0)
        cidx = jax.lax.broadcasted_iota(jnp.uint32, out.shape, 1)
        idx = (row0 + ridx) * jnp.uint32(width) + cidx

        seed = seed_ref[0].astype(jnp.uint32)
        z = idx + seed * jnp.uint32(0x9E3779B9)
        z = (z ^ (z >> 16)) * jnp.uint32(0x85EBCA6B)
        z = (z ^ (z >> 13)) * jnp.uint32(0xC2B2AE35)
        z = z ^ (z >> 16)

        # Integer threshold keep-test (no int->float cast, no float compare).
        threshold = jnp.uint32(int(round(float(dropout_rate) * float(1 << 24))))
        keep = (z & jnp.uint32(0x00FFFFFF)) >= threshold

        # One select of constants + one multiply (inverted-dropout scaling).
        scale = jnp.asarray(1.0 / (1.0 - float(dropout_rate)), dtype=out.dtype)
        zero = jnp.zeros((), dtype=out.dtype)
        out = out * jnp.where(keep, scale, zero)

    o_ref[...] = out.astype(o_ref.dtype)


def _pick_batch_tile(batch, row_bytes):
    """Pick TB so one (TB, W) block is ~4 MiB; total pipeline VMEM stays < ~24 MiB."""
    budget = 4 * 1024 * 1024
    tb = budget // max(int(row_bytes), 1)
    if tb >= batch:
        return batch                       # full batch in one block
    tb = max(8, (tb // 8) * 8)             # keep sublane dim a multiple of 8
    return min(tb, batch)


def position_embs(x, pos_embedding, *, dropout_rate=0.1, training=False, seed=0):
    """x: (B, S, E); pos_embedding: (1, S, E) -> (B, S, E). Matches PositionEmbs.forward."""
    B, S, E = x.shape
    assert pos_embedding.shape == (1, S, E)

    W = S * E
    x2 = x.reshape(B, W)                   # lane-dense layout: last dim = S*E
    pos2 = pos_embedding.reshape(1, W)

    tb = _pick_batch_tile(B, W * x.dtype.itemsize)
    grid = (pl.cdiv(B, tb),)

    kernel = functools.partial(
        _pos_embs_kernel,
        dropout_rate=float(dropout_rate),
        training=bool(training),
        width=W,
    )
    seed_arr = jnp.asarray([seed], dtype=jnp.int32)

    out2 = pl.pallas_call(
        kernel,
        out_shape=jax.ShapeDtypeStruct((B, W), x.dtype),
        grid_spec=pltpu.PrefetchScalarGridSpec(
            num_scalar_prefetch=1,                          # seed -> SMEM
            grid=grid,
            in_specs=[
                pl.BlockSpec((tb, W), lambda b, seed_ref: (b, 0)),   # x tile
                pl.BlockSpec((1, W), lambda b, seed_ref: (0, 0)),    # pos (bcast, re-used)
            ],
            out_specs=pl.BlockSpec((tb, W), lambda b, seed_ref: (b, 0)),
        ),
        compiler_params=pltpu.CompilerParams(
            dimension_semantics=("parallel",),              # order-independent -> megacore OK
            vmem_limit_bytes=32 * 1024 * 1024,
        ),
    )(seed_arr, x2, pos2)

    return out2.reshape(B, S, E)


if __name__ == "__main__":
    # Small shapes: batch=2, num_patches=7 -> seq = num_patches + 1 = 8, emb_dim=32
    B, NUM_PATCHES, EMB = 2, 7, 32
    S = NUM_PATCHES + 1

    key = jax.random.PRNGKey(0)
    kx, kp = jax.random.split(key)
    x = jax.random.normal(kx, (B, S, EMB), dtype=jnp.float32)
    # Deterministic parameter init (torch.randn-equivalent shape (1, S, EMB)).
    pos_embedding = jax.random.normal(kp, (1, S, EMB), dtype=jnp.float32)

    # Eval mode (nn.Dropout in eval is identity) — check against plain-JAX reference.
    out_eval = jax.block_until_ready(
        position_embs(x, pos_embedding, dropout_rate=0.1, training=False)
    )
    ref_eval = x + pos_embedding
    assert out_eval.shape == (B, S, EMB)
    assert jnp.allclose(out_eval, ref_eval, atol=1e-6), "eval-mode mismatch"

    # Training mode — in-kernel counter-based dropout with inverted scaling.
    out_train = jax.block_until_ready(
        position_embs(x, pos_embedding, dropout_rate=0.1, training=True, seed=42)
    )
    assert out_train.shape == (B, S, EMB)
    # Surviving elements equal scaled (x + pos); dropped elements are exactly 0.
    scaled = ref_eval / (1.0 - 0.1)
    ok = jnp.logical_or(jnp.isclose(out_train, scaled, atol=1e-5), out_train == 0.0)
    assert bool(jnp.all(ok)), "train-mode dropout values inconsistent"

    print("KERNEL_OK")
</pallas_src>

<mosaic_0001>
module attributes {stable_mosaic.version = 11 : i64} {
  func.func @_pos_embs_kernel(%arg0: i32, %arg1: memref<1xi32, #tpu.memory_space<smem>>, %arg2: memref<2x256xf32, #tpu.memory_space<vmem>>, %arg3: memref<1x256xf32, #tpu.memory_space<vmem>>, %arg4: memref<2x256xf32, #tpu.memory_space<vmem>>) attributes {dimension_semantics = [#tpu.dimension_semantics<parallel>], iteration_bounds = array<i64: 1>, scalar_prefetch = 1 : i64, scratch_operands = 0 : i64, tpu.core_type = #tpu.core_type<tc>, window_params = [{transform_indices = @transform_0, window_bounds = array<i64: 2, 256>}, {pipeline_mode = #tpu.pipeline_mode<synchronous>, transform_indices = @transform_1, window_bounds = array<i64: 1, 256>}, {transform_indices = @transform_2, window_bounds = array<i64: 2, 256>}]} {
    %c0 = arith.constant 0 : index
    %c0_0 = arith.constant 0 : index
    %0 = vector.load %arg2[%c0, %c0_0] : memref<2x256xf32, #tpu.memory_space<vmem>>, vector<2x256xf32>
    %c0_1 = arith.constant 0 : index
    %c0_2 = arith.constant 0 : index
    %1 = vector.load %arg3[%c0_1, %c0_2] : memref<1x256xf32, #tpu.memory_space<vmem>>, vector<1x256xf32>
    %2 = vector.broadcast %1 : vector<1x256xf32> to vector<2x256xf32>
    %3 = arith.addf %0, %2 : vector<2x256xf32>
    %c0_3 = arith.constant 0 : index
    %c0_4 = arith.constant 0 : index
    %4 = vector.load %arg4[%c0_3, %c0_4] : memref<2x256xf32, #tpu.memory_space<vmem>>, vector<2x256xf32>
    tpu.vector_store %arg4[%c0_3, %c0_4], %3 {strides = array<i32>} : memref<2x256xf32, #tpu.memory_space<vmem>>, vector<2x256xf32>,
    return
  }
  func.func @transform_0(%arg0: i32, %arg1: memref<1xi32, #tpu.memory_space<smem>>) -> (i32, i32) {
    %c0_i32 = arith.constant 0 : i32
    %c0_i32_0 = arith.constant 0 : i32
    return %arg0, %c0_i32 : i32, i32
  }
  func.func @transform_1(%arg0: i32, %arg1: memref<1xi32, #tpu.memory_space<smem>>) -> (i32, i32) {
    %c0_i32 = arith.constant 0 : i32
    %c0_i32_0 = arith.constant 0 : i32
    %c0_i32_1 = arith.constant 0 : i32
    return %c0_i32, %c0_i32_0 : i32, i32
  }
  func.func @transform_2(%arg0: i32, %arg1: memref<1xi32, #tpu.memory_space<smem>>) -> (i32, i32) {
    %c0_i32 = arith.constant 0 : i32
    %c0_i32_0 = arith.constant 0 : i32
    return %arg0, %c0_i32 : i32, i32
  }
}

</mosaic_0001>

<llo_original>
// kernel: tpu_custom_call.1
$region0: #{tpu_custom_call.1}
  #allocation0 [shape = 'u32[]', space=smem, size = 0x4, offset = 0x4, fixed_abs, tag = 'smem constant byte address 0x4 - core index']
  #allocation1 [shape = 'u32[144,128]{1,0:T(1,128)}', space=vmem, size = 0x12000, scoped, tag = 'internal scratch']
  #allocation2 [shape = 's32[1]{0}', space=sflag, size = 0x4, scoped, tag = 'scoped memory for tpu_custom_call.1']
  #allocation3 [shape = 's32[1]{0:T(128)S(6)}', space=smem, size = 0x200, scoped, tag = 'prefetched SMEM operand 0']
  %s0 = inlined_call_operand.<no memory space> [shape: s32[1], index: 0, kind: input, shape index: {}]
  %s1 = inlined_call_operand.hbm [shape: f32[2,256], index: 1, kind: input, shape index: {}]
  %s2 = inlined_call_operand.vmem [shape: f32[1,256], index: 2, kind: input, shape index: {}]
  %s3 = inlined_call_operand.hbm [shape: f32[2,256], index: 3, kind: output, shape index: {}]
  %s4 = sld [smem:[#allocation0]]
  $region22: #{tpu_custom_call.1} parent=0
    _
  %s6 = ssub.s32 1, %s4
  %s7 = scalar_select 0, %s6, %s4
  %8 = sst [smem:[#allocation3]] %s0
  $region1: #{tpu_custom_call.1} parent=0
    #allocation4 [shape = 'u8[2048]{0}', space=vmem, size = 0x800, scoped, tag = 'input window, operand 1, single buffered']
    #allocation5 [shape = 's32[1]{0}', space=sflag, size = 0x4, scoped, tag = 'scoped memory for tpu_custom_call.1']
    #allocation6 [shape = 's32[1]{0}', space=sflag, size = 0x4, scoped, tag = 'scoped memory for tpu_custom_call.1']
    #allocation7 [shape = 'u8[2048]{0}', space=vmem, size = 0x800, scoped, tag = 'output window, operand 0, single buffered']
    %9 = vsyncpa [#allocation5], 0
    %10 = vsyncpa [#allocation6], 0
    // Predicated region
    $region2: #{tpu_custom_call.1} parent=1 // pred_check
      _
    $region3: #{tpu_custom_call.1} parent=1 // pred_check_branch
      %12 = sbr.rel (0) target = $region5
    $region4: #{tpu_custom_call.1} parent=1 // pred_region
      %s14 = ssub.s32 64, 64
      %15 = vsyncadd [#allocation5], %s14
      %s17 = sshll.u32 [#allocation4], 4
      %s18 = int_to_ptr.vmem [resolvable:$true] %s17
      %20 = dma.hbm_to_vmem [thread:$0]  %s1, 64, %s18, [#allocation5]
    $region5: #{tpu_custom_call.1} parent=1 // pred_fallthru
      _
    // Predicated region
    $region6: #{tpu_custom_call.1} parent=1 // pred_check
      _
    $region7: #{tpu_custom_call.1} parent=1 // pred_check_branch
      %22 = sbr.rel (0) target = $region9
    $region8: #{tpu_custom_call.1} parent=1 // pred_region
      _
    $region9: #{tpu_custom_call.1} parent=1 // pred_fallthru
      _
    // Predicated region
    $region10: #{tpu_custom_call.1} parent=1 // pred_check
      _
    $region11: #{tpu_custom_call.1} parent=1 // pred_check_branch
      %24 = sbr.rel (0) target = $region13
    $region12: #{tpu_custom_call.1} parent=1 // pred_region
      %25 = dma.done [#allocation5], 64
    $region13: #{tpu_custom_call.1} parent=1 // pred_fallthru
      _
    %v26 = vld [vmem:[#allocation4] sm:$0xf]
    %v27 = vld [vmem:[%s2] sm:$0x3]
    %v29 = vlaneseq
    %v30 = vshrl.u32 %v29, 7
    %v31 = vsub.s32 0, %v30
    %v32 = vrot.slane %v27, %v31
    %v33 = vlaneseq
    %v34 = vshrl.u32 %v33, 7
    %v35 = vsub.s32 1, %v34
    %v36 = vrot.slane %v27, %v35
    %v37 = vcombine.low %v32, %v36
    %v39 = vunpack.c.l.s4 1983009808
    %v40 = vunpack.c.0.s8 %v39
    %v41 = vlaneseq
    %v42 = vshrl.u32 %v41, 7
    %v43 = vsub.s32 %v40, %v42
    %v44 = vrot.slane %v37, %v43
    %v46 = vadd.f32 %v26, %v44
    %47 = vst [vmem:[#allocation7] sm:$0xf] %v46
    // Predicated region
    $region14: #{tpu_custom_call.1} parent=1 // pred_check
      _
    $region15: #{tpu_custom_call.1} parent=1 // pred_check_branch
      %49 = sbr.rel (0) target = $region17
    $region16: #{tpu_custom_call.1} parent=1 // pred_region
      %s51 = ssub.s32 64, 64
      %52 = vsyncadd [#allocation6], %s51
      %s54 = sshll.u32 [#allocation7], 4
      %s55 = int_to_ptr.vmem [resolvable:$true] %s54
      %57 = dma.vmem_to_hbm [thread:$0]  %s55, 64, %s3, [#allocation6]
    $region17: #{tpu_custom_call.1} parent=1 // pred_fallthru
      _
    // Predicated region
    $region18: #{tpu_custom_call.1} parent=1 // pred_check
      _
    $region19: #{tpu_custom_call.1} parent=1 // pred_check_branch
      %59 = sbr.rel (0) target = $region21
    $region20: #{tpu_custom_call.1} parent=1 // pred_region
      %60 = dma.done [#allocation6], 64
    $region21: #{tpu_custom_call.1} parent=1 // pred_fallthru
      _
    %61 = vsyncpa [#allocation5], 1
    %62 = vsyncpa [#allocation6], 1

</llo_original>
